<compile_context>
chip_gen: v6e
topology: v6e:2x2x1
jax: 0.10.0
libtpu: 0.0.40
codegen_flags: <defaults>
</compile_context>

<pallas_src>
import functools

import jax
import jax.numpy as jnp
from jax import lax
from jax.experimental import pallas as pl
from jax.experimental.pallas import tpu as pltpu

LANE = 128                       # lane width: feature dims padded to this
TILE = 128                       # row / reduction tile (128-aligned for all gens)
VMEM_LIMIT = 32 * 1024 * 1024    # explicit scoped-VMEM cap (safe on v5e/v6e/v7x)


def _round_up(x, m):
    return (x + m - 1) // m * m


def _pad2d(x, rows, cols):
    return jnp.pad(x, ((0, rows - x.shape[0]), (0, cols - x.shape[1])))


# ---------------------------------------------------------------------------
# Kernel 1: feature transform  XW = X @ W   (producer stage, row-tiled)
# ---------------------------------------------------------------------------
def _transform_kernel(x_ref, w_ref, o_ref):
    o_ref[...] = jnp.dot(x_ref[...], w_ref[...],
                         preferred_element_type=jnp.float32)


def _transform(x, w, *, tm=TILE):
    n_pad, f_in = x.shape
    f_out = w.shape[1]
    return pl.pallas_call(
        _transform_kernel,
        out_shape=jax.ShapeDtypeStruct((n_pad, f_out), jnp.float32),
        grid=(n_pad // tm,),
        in_specs=[pl.BlockSpec((tm, f_in), lambda i: (i, 0)),
                  pl.BlockSpec((f_in, f_out), lambda i: (0, 0))],
        out_specs=pl.BlockSpec((tm, f_out), lambda i: (i, 0)),
        compiler_params=pltpu.CompilerParams(
            dimension_semantics=("parallel",),
            vmem_limit_bytes=VMEM_LIMIT),
    )(x, w)


# ---------------------------------------------------------------------------
# Kernel 2: aggregation  out = act(A_hat @ XW + b)   (row x reduction grid)
# ---------------------------------------------------------------------------
def _aggregate_kernel(a_ref, h_ref, b_ref, o_ref, acc_ref, *,
                      activation, f_valid):
    k = pl.program_id(1)

    @pl.when(k == 0)
    def _():
        acc_ref[...] = jnp.zeros_like(acc_ref)

    acc_ref[...] += jnp.dot(a_ref[...], h_ref[...],
                            preferred_element_type=jnp.float32)

    @pl.when(k == pl.num_programs(1) - 1)
    def _():
        # Bias add / activation / softmax happen once per output tile only.
        h = acc_ref[...] + b_ref[...]
        if activation == "relu":
            o_ref[...] = jnp.maximum(h, 0.0)
        else:
            # log_softmax over the first `f_valid` lanes; padded lanes are
            # excluded from the max and contribute 0 to the sum.
            lane = lax.broadcasted_iota(jnp.int32, h.shape, 1)
            valid = lane < f_valid
            m = jnp.max(jnp.where(valid, h, -jnp.inf), axis=1, keepdims=True)
            z = h - m
            p = jnp.where(valid, jnp.exp(z), 0.0)
            lse = jnp.log(jnp.sum(p, axis=1, keepdims=True))
            o_ref[...] = jnp.where(valid, z - lse, 0.0)


def _aggregate(a, h, b, *, activation, f_valid, tm=TILE, tk=TILE):
    n_pad = a.shape[0]
    f_pad = h.shape[1]
    kernel = functools.partial(_aggregate_kernel,
                               activation=activation, f_valid=f_valid)
    return pl.pallas_call(
        kernel,
        out_shape=jax.ShapeDtypeStruct((n_pad, f_pad), jnp.float32),
        grid=(n_pad // tm, n_pad // tk),
        in_specs=[pl.BlockSpec((tm, tk), lambda i, k: (i, k)),      # A_hat tile
                  pl.BlockSpec((tk, f_pad), lambda i, k: (k, 0)),   # XW rows
                  pl.BlockSpec((1, f_pad), lambda i, k: (0, 0))],   # bias row
        out_specs=pl.BlockSpec((tm, f_pad), lambda i, k: (i, 0)),
        scratch_shapes=[pltpu.VMEM((tm, f_pad), jnp.float32)],
        compiler_params=pltpu.CompilerParams(
            dimension_semantics=("parallel", "arbitrary"),
            vmem_limit_bytes=VMEM_LIMIT),
    )(a, h, b)


# ---------------------------------------------------------------------------
# Full GCN forward (two GCNConv layers + log_softmax)
# ---------------------------------------------------------------------------
def gcn_forward(a_hat, x, w1, b1, w2, b2, *, tile=TILE):
    n, f_in = x.shape
    f_hid = w1.shape[1]
    f_out = w2.shape[1]

    n_pad = _round_up(n, tile)
    f_in_p = _round_up(f_in, LANE)
    f_hid_p = _round_up(f_hid, LANE)
    f_out_p = _round_up(f_out, LANE)

    # Zero-pad everything to lane/tile boundaries (zeros cannot change results;
    # padded softmax lanes are masked in-kernel).
    a_p = _pad2d(a_hat.astype(jnp.float32), n_pad, n_pad)
    x_p = _pad2d(x.astype(jnp.float32), n_pad, f_in_p)
    w1_p = _pad2d(w1.astype(jnp.float32), f_in_p, f_hid_p)
    b1_p = _pad2d(b1.reshape(1, -1).astype(jnp.float32), 1, f_hid_p)
    w2_p = _pad2d(w2.astype(jnp.float32), f_hid_p, f_out_p)
    b2_p = _pad2d(b2.reshape(1, -1).astype(jnp.float32), 1, f_out_p)

    # Layer 1: relu(A_hat @ (X @ W1) + b1)
    xw1 = _transform(x_p, w1_p, tm=tile)
    h1 = _aggregate(a_p, xw1, b1_p, activation="relu",
                    f_valid=f_hid, tm=tile, tk=tile)
    # Layer 2: log_softmax(A_hat @ (H1 @ W2) + b2)
    xw2 = _transform(h1, w2_p, tm=tile)
    out = _aggregate(a_p, xw2, b2_p, activation="log_softmax",
                     f_valid=f_out, tm=tile, tk=tile)
    return out[:n, :f_out]


# ---------------------------------------------------------------------------
# Plain-JAX glue + reference
# ---------------------------------------------------------------------------
def normalized_adjacency(edge_index, num_nodes):
    """Dense D^{-1/2}(A+I)D^{-1/2} from a (2, E) edge_index."""
    # TODO(synk): for real (large, sparse) graphs replace this dense A_hat with
    # a block-sparse SpMM schedule (PrefetchScalarGridSpec + pl.when skip).
    row, col = edge_index[0], edge_index[1]
    a = jnp.zeros((num_nodes, num_nodes), jnp.float32)
    a = a.at[row, col].set(1.0)
    idx = jnp.arange(num_nodes)
    a = a.at[idx, idx].set(1.0)  # add self loops
    deg = a.sum(axis=1)
    dinv = jnp.where(deg > 0, 1.0 / jnp.sqrt(deg), 0.0)
    return a * dinv[:, None] * dinv[None, :]


def reference_forward(a_hat, x, w1, b1, w2, b2):
    h = jnp.maximum(a_hat @ (x @ w1) + b1, 0.0)
    h = a_hat @ (h @ w2) + b2
    return jax.nn.log_softmax(h, axis=1)


if __name__ == "__main__":
    key = jax.random.PRNGKey(0)
    kx, kw1, kb1, kw2, kb2, kxl, kel = jax.random.split(key, 7)

    F_IN, F_HID, F_OUT = 3, 4, 2   # GCNConv(3, 4) and GCNConv(4, 2)
    w1 = jax.random.normal(kw1, (F_IN, F_HID), jnp.float32) * 0.5
    b1 = jax.random.normal(kb1, (1, F_HID), jnp.float32) * 0.1
    w2 = jax.random.normal(kw2, (F_HID, F_OUT), jnp.float32) * 0.5
    b2 = jax.random.normal(kb2, (1, F_OUT), jnp.float32) * 0.1

    # --- case 1: the 8-person demo graph (ring + chords, undirected) ---------
    N1 = 8
    x1 = jax.random.normal(kx, (N1, F_IN), jnp.float32)
    src = jnp.array([0, 1, 2, 3, 4, 5, 6, 7, 0, 2], jnp.int32)
    dst = jnp.array([1, 2, 3, 4, 5, 6, 7, 0, 4, 6], jnp.int32)
    ei1 = jnp.stack([jnp.concatenate([src, dst]), jnp.concatenate([dst, src])])
    a1 = normalized_adjacency(ei1, N1)

    out1 = jax.block_until_ready(gcn_forward(a1, x1, w1, b1, w2, b2))
    ref1 = reference_forward(a1, x1, w1, b1, w2, b2)
    assert out1.shape == (N1, F_OUT)
    assert jnp.allclose(out1, ref1, atol=1e-4, rtol=1e-4)

    # --- case 2: larger random graph so the (row, K) grid has >1 tile each ---
    N2 = 300
    x2 = jax.random.normal(kxl, (N2, F_IN), jnp.float32)
    e = jax.random.randint(kel, (2, 900), 0, N2, dtype=jnp.int32)
    ei2 = jnp.concatenate([e, e[::-1]], axis=1)  # symmetrize -> undirected
    a2 = normalized_adjacency(ei2, N2)

    out2 = jax.block_until_ready(gcn_forward(a2, x2, w1, b1, w2, b2))
    ref2 = reference_forward(a2, x2, w1, b1, w2, b2)
    assert out2.shape == (N2, F_OUT)
    assert jnp.allclose(out2, ref2, atol=1e-4, rtol=1e-4)

    print("KERNEL_OK")
</pallas_src>

<mosaic_0001>
module attributes {stable_mosaic.version = 11 : i64} {
  func.func @_transform_kernel(%arg0: i32, %arg1: memref<128x128xf32, #tpu.memory_space<vmem>>, %arg2: memref<128x128xf32, #tpu.memory_space<vmem>>, %arg3: memref<128x128xf32, #tpu.memory_space<vmem>>) attributes {dimension_semantics = [#tpu.dimension_semantics<parallel>], iteration_bounds = array<i64: 1>, scalar_prefetch = 0 : i64, scratch_operands = 0 : i64, tpu.core_type = #tpu.core_type<tc>, window_params = [{transform_indices = @transform_0, window_bounds = array<i64: 128, 128>}, {pipeline_mode = #tpu.pipeline_mode<synchronous>, transform_indices = @transform_1, window_bounds = array<i64: 128, 128>}, {transform_indices = @transform_2, window_bounds = array<i64: 128, 128>}]} {
    %c0 = arith.constant 0 : index
    %c0_0 = arith.constant 0 : index
    %0 = vector.load %arg1[%c0, %c0_0] : memref<128x128xf32, #tpu.memory_space<vmem>>, vector<128x128xf32>
    %c0_1 = arith.constant 0 : index
    %c0_2 = arith.constant 0 : index
    %1 = vector.load %arg2[%c0_1, %c0_2] : memref<128x128xf32, #tpu.memory_space<vmem>>, vector<128x128xf32>
    %cst = arith.constant dense<0.000000e+00> : vector<128x128xf32>
    %2 = tpu.matmul %0, %1, %cst {dimension_numbers = #tpu.dot_dimension_numbers<[1], [0], [0], [1], [0, 0, 1, 1], [], []>} : vector<128x128xf32>, vector<128x128xf32>, vector<128x128xf32> -> vector<128x128xf32>
    %c0_3 = arith.constant 0 : index
    %c0_4 = arith.constant 0 : index
    %3 = vector.load %arg3[%c0_3, %c0_4] : memref<128x128xf32, #tpu.memory_space<vmem>>, vector<128x128xf32>
    tpu.vector_store %arg3[%c0_3, %c0_4], %2 {strides = array<i32>} : memref<128x128xf32, #tpu.memory_space<vmem>>, vector<128x128xf32>,
    return
  }
  func.func @transform_0(%arg0: i32) -> (i32, i32) {
    %c0_i32 = arith.constant 0 : i32
    %c0_i32_0 = arith.constant 0 : i32
    return %arg0, %c0_i32 : i32, i32
  }
  func.func @transform_1(%arg0: i32) -> (i32, i32) {
    %c0_i32 = arith.constant 0 : i32
    %c0_i32_0 = arith.constant 0 : i32
    %c0_i32_1 = arith.constant 0 : i32
    return %c0_i32, %c0_i32_0 : i32, i32
  }
  func.func @transform_2(%arg0: i32) -> (i32, i32) {
    %c0_i32 = arith.constant 0 : i32
    %c0_i32_0 = arith.constant 0 : i32
    return %arg0, %c0_i32 : i32, i32
  }
}

</mosaic_0001>

<llo_original>
// kernel: tpu_custom_call.1
$region0: #{tpu_custom_call.1}
  #allocation0 [shape = 'u32[]', space=smem, size = 0x4, offset = 0x4, fixed_abs, tag = 'smem constant byte address 0x4 - core index']
  #allocation1 [shape = 'u32[144,128]{1,0:T(1,128)}', space=vmem, size = 0x12000, scoped, tag = 'internal scratch']
  %s0 = inlined_call_operand.hbm [shape: f32[128,128], index: 0, kind: input, shape index: {}]
  %s1 = inlined_call_operand.hbm [shape: f32[128,128], index: 1, kind: input, shape index: {}]
  %s2 = inlined_call_operand.hbm [shape: f32[128,128], index: 2, kind: output, shape index: {}]
  %s3 = sld [smem:[#allocation0]]
  $region26: #{tpu_custom_call.1} parent=0
    _
  %s5 = ssub.s32 1, %s3
  %s6 = scalar_select 0, %s5, %s3
  $region1: #{tpu_custom_call.1} parent=0
    #allocation2 [shape = 'u8[65536]{0}', space=vmem, size = 0x10000, scoped, tag = 'input window, operand 0, single buffered']
    #allocation3 [shape = 's32[1]{0}', space=sflag, size = 0x4, scoped, tag = 'scoped memory for tpu_custom_call.1']
    #allocation4 [shape = 's32[1]{0}', space=sflag, size = 0x4, scoped, tag = 'scoped memory for tpu_custom_call.1']
    #allocation5 [shape = 'u8[65536]{0}', space=vmem, size = 0x10000, scoped, tag = 'input window, operand 1, single buffered']
    #allocation6 [shape = 's32[1]{0}', space=sflag, size = 0x4, scoped, tag = 'scoped memory for tpu_custom_call.1']
    #allocation7 [shape = 'u8[65536]{0}', space=vmem, size = 0x10000, scoped, tag = 'output window, operand 0, single buffered']
    %7 = vsyncpa [#allocation3], 0
    %8 = vsyncpa [#allocation6], 0
    %9 = vsyncpa [#allocation4], 0
    // Predicated region
    $region2: #{tpu_custom_call.1} parent=1 // pred_check
      _
    $region3: #{tpu_custom_call.1} parent=1 // pred_check_branch
      %11 = sbr.rel (0) target = $region5
    $region4: #{tpu_custom_call.1} parent=1 // pred_region
      %s13 = ssub.s32 2048, 2048
      %14 = vsyncadd [#allocation3], %s13
      %s15 = sshll.u32 [#allocation2], 4
      %s16 = int_to_ptr.vmem [resolvable:$true] %s15
      %21 = dma.hbm_to_vmem [thread:$0]  %s0, 2048, %s16, [#allocation3], 128, 128, 8
    $region5: #{tpu_custom_call.1} parent=1 // pred_fallthru
      _
    // Predicated region
    $region6: #{tpu_custom_call.1} parent=1 // pred_check
      _
    $region7: #{tpu_custom_call.1} parent=1 // pred_check_branch
      %23 = sbr.rel (0) target = $region9
    $region8: #{tpu_custom_call.1} parent=1 // pred_region
      %s25 = ssub.s32 2048, 2048
      %26 = vsyncadd [#allocation6], %s25
      %s27 = sshll.u32 [#allocation5], 4
      %s28 = int_to_ptr.vmem [resolvable:$true] %s27
      %33 = dma.hbm_to_vmem [thread:$0]  %s1, 2048, %s28, [#allocation6], 128, 128, 8
    $region9: #{tpu_custom_call.1} parent=1 // pred_fallthru
      _
    // Predicated region
    $region10: #{tpu_custom_call.1} parent=1 // pred_check
      _
    $region11: #{tpu_custom_call.1} parent=1 // pred_check_branch
      %35 = sbr.rel (0) target = $region13
    $region12: #{tpu_custom_call.1} parent=1 // pred_region
      %36 = dma.done [#allocation3], 2048
    $region13: #{tpu_custom_call.1} parent=1 // pred_fallthru
      _
    // Predicated region
    $region14: #{tpu_custom_call.1} parent=1 // pred_check
      _
    $region15: #{tpu_custom_call.1} parent=1 // pred_check_branch
      %38 = sbr.rel (0) target = $region17
    $region16: #{tpu_custom_call.1} parent=1 // pred_region
      %39 = dma.done [#allocation6], 2048
    $region17: #{tpu_custom_call.1} parent=1 // pred_fallthru
      _
    %v40 = vld [vmem:[#allocation2] sm:$0xff]
    %v41 = vld [vmem:[#allocation2 + $0x8] sm:$0xff]
    %v42 = vld [vmem:[#allocation2 + $0x10] sm:$0xff]
    %v43 = vld [vmem:[#allocation2 + $0x18] sm:$0xff]
    %v44 = vld [vmem:[#allocation2 + $0x20] sm:$0xff]
    %v45 = vld [vmem:[#allocation2 + $0x28] sm:$0xff]
    %v46 = vld [vmem:[#allocation2 + $0x30] sm:$0xff]
    %v47 = vld [vmem:[#allocation2 + $0x38] sm:$0xff]
    %v48 = vld [vmem:[#allocation2 + $0x40] sm:$0xff]
    %v49 = vld [vmem:[#allocation2 + $0x48] sm:$0xff]
    %v50 = vld [vmem:[#allocation2 + $0x50] sm:$0xff]
    %v51 = vld [vmem:[#allocation2 + $0x58] sm:$0xff]
    %v52 = vld [vmem:[#allocation2 + $0x60] sm:$0xff]
    %v53 = vld [vmem:[#allocation2 + $0x68] sm:$0xff]
    %v54 = vld [vmem:[#allocation2 + $0x70] sm:$0xff]
    %v55 = vld [vmem:[#allocation2 + $0x78] sm:$0xff]
    %v56 = vld [vmem:[#allocation5] sm:$0xff]
    %v57 = vld [vmem:[#allocation5 + $0x8] sm:$0xff]
    %v58 = vld [vmem:[#allocation5 + $0x10] sm:$0xff]
    %v59 = vld [vmem:[#allocation5 + $0x18] sm:$0xff]
    %v60 = vld [vmem:[#allocation5 + $0x20] sm:$0xff]
    %v61 = vld [vmem:[#allocation5 + $0x28] sm:$0xff]
    %v62 = vld [vmem:[#allocation5 + $0x30] sm:$0xff]
    %v63 = vld [vmem:[#allocation5 + $0x38] sm:$0xff]
    %v64 = vld [vmem:[#allocation5 + $0x40] sm:$0xff]
    %v65 = vld [vmem:[#allocation5 + $0x48] sm:$0xff]
    %v66 = vld [vmem:[#allocation5 + $0x50] sm:$0xff]
    %v67 = vld [vmem:[#allocation5 + $0x58] sm:$0xff]
    %v68 = vld [vmem:[#allocation5 + $0x60] sm:$0xff]
    %v69 = vld [vmem:[#allocation5 + $0x68] sm:$0xff]
    %v70 = vld [vmem:[#allocation5 + $0x70] sm:$0xff]
    %v71 = vld [vmem:[#allocation5 + $0x78] sm:$0xff]
    %72 = vmatprep.subr.mxu0 0.0
    %73 = vmatpush1.msra.mxu0 %v71
    %74 = vmatprep.subr.mxu0 0.0
    %75 = vmatpush1.msra.mxu0 %v70
    %76 = vmatprep.subr.mxu0 0.0
    %77 = vmatpush1.msra.mxu0 %v69
    %78 = vmatprep.subr.mxu0 0.0
    %79 = vmatpush1.msra.mxu0 %v68
    %80 = vmatprep.subr.mxu0 0.0
    %81 = vmatpush1.msra.mxu0 %v67
    %82 = vmatprep.subr.mxu0 0.0
    %83 = vmatpush1.msra.mxu0 %v66
    %84 = vmatprep.subr.mxu0 0.0
    %85 = vmatpush1.msra.mxu0 %v65
    %86 = vmatprep.subr.mxu0 0.0
    %87 = vmatpush1.msra.mxu0 %v64
    %88 = vmatprep.subr.mxu0 0.0
    %89 = vmatpush1.msra.mxu0 %v63
    %90 = vmatprep.subr.mxu0 0.0
    %91 = vmatpush1.msra.mxu0 %v62
    %92 = vmatprep.subr.mxu0 0.0
    %93 = vmatpush1.msra.mxu0 %v61
    %94 = vmatprep.subr.mxu0 0.0
    %95 = vmatpush1.msra.mxu0 %v60
    %96 = vmatprep.subr.mxu0 0.0
    %97 = vmatpush1.msra.mxu0 %v59
    %98 = vmatprep.subr.mxu0 0.0
    %99 = vmatpush1.msra.mxu0 %v58
    %100 = vmatprep.subr.mxu0 0.0
    %101 = vmatpush1.msra.mxu0 %v57
    %102 = vmatprep.subr.mxu0 0.0
    %103 = vmatpush1.msra.mxu0 %v56
    %104 = vmatprep.subr.mxu0 0.0
    %105 = vmatpush2.msra.mxu0 0.0
    %106 = vmatprep.subr.mxu0 0.0
    %107 = vmatpush2.msra.mxu0 0.0
    %108 = vmatprep.subr.mxu0 0.0
    %109 = vmatpush2.msra.mxu0 0.0
    %110 = vmatprep.subr.mxu0 0.0
    %111 = vmatpush2.msra.mxu0 0.0
    %112 = vmatprep.subr.mxu0 0.0
    %113 = vmatpush2.msra.mxu0 0.0
    %114 = vmatprep.subr.mxu0 0.0
    %115 = vmatpush2.msra.mxu0 0.0
    %116 = vmatprep.subr.mxu0 0.0
    %117 = vmatpush2.msra.mxu0 0.0
    %118 = vmatprep.subr.mxu0 0.0
    %119 = vmatpush2.msra.mxu0 0.0
    %120 = vmatprep.subr.mxu0 0.0
    %121 = vmatpush2.msra.mxu0 0.0
    %122 = vmatprep.subr.mxu0 0.0
    %123 = vmatpush2.msra.mxu0 0.0
    %124 = vmatprep.subr.mxu0 0.0
    %125 = vmatpush2.msra.mxu0 0.0
    %126 = vmatprep.subr.mxu0 0.0
    %127 = vmatpush2.msra.mxu0 0.0
    %128 = vmatprep.subr.mxu0 0.0
    %129 = vmatpush2.msra.mxu0 0.0
    %130 = vmatprep.subr.mxu0 0.0
    %131 = vmatpush2.msra.mxu0 0.0
    %132 = vmatprep.subr.mxu0 0.0
    %133 = vmatpush2.msra.mxu0 0.0
    %134 = vmatprep.subr.mxu0 0.0
    %135 = vmatpush2.msra.mxu0 0.0
    %136 = vmatprep.mubr.f32.mxu0 0.0
    %137 = vmatmul.mubr.f32.gmra.mxu0 %v40
    %v138 = vpop.f32.mrf.mxu0
    %v139 = vadd.f32 0.0, %v138
    %v140 = vpop.f32.mrf.mxu0
    %141 = vmatprep.mubr.f32.mxu0 0.0
    %142 = vmatmul.mubr.f32.gmra.mxu0 %v41
    %v143 = vpop.f32.mrf.mxu0
    %v144 = vadd.f32 0.0, %v143
    %v145 = vpop.f32.mrf.mxu0
    %146 = vmatprep.mubr.f32.mxu0 0.0
    %147 = vmatmul.mubr.f32.gmra.mxu0 %v42
    %v148 = vpop.f32.mrf.mxu0
    %v149 = vadd.f32 0.0, %v148
    %v150 = vpop.f32.mrf.mxu0
    %151 = vmatprep.mubr.f32.mxu0 0.0
    %152 = vmatmul.mubr.f32.gmra.mxu0 %v43
    %v153 = vpop.f32.mrf.mxu0
    %v154 = vadd.f32 0.0, %v153
    %v155 = vpop.f32.mrf.mxu0
    %156 = vmatprep.mubr.f32.mxu0 0.0
    %157 = vmatmul.mubr.f32.gmra.mxu0 %v44
    %v158 = vpop.f32.mrf.mxu0
    %v159 = vadd.f32 0.0, %v158
    %v160 = vpop.f32.mrf.mxu0
    %161 = vmatprep.mubr.f32.mxu0 0.0
    %162 = vmatmul.mubr.f32.gmra.mxu0 %v45
    %v163 = vpop.f32.mrf.mxu0
    %v164 = vadd.f32 0.0, %v163
    %v165 = vpop.f32.mrf.mxu0
    %166 = vmatprep.mubr.f32.mxu0 0.0
    %167 = vmatmul.mubr.f32.gmra.mxu0 %v46
    %v168 = vpop.f32.mrf.mxu0
    %v169 = vadd.f32 0.0, %v168
    %v170 = vpop.f32.mrf.mxu0
    %171 = vmatprep.mubr.f32.mxu0 0.0
    %172 = vmatmul.mubr.f32.gmra.mxu0 %v47
    %v173 = vpop.f32.mrf.mxu0
    %v174 = vadd.f32 0.0, %v173
    %v175 = vpop.f32.mrf.mxu0
    %176 = vmatprep.mubr.f32.mxu0 0.0
    %177 = vmatmul.mubr.f32.gmra.mxu0 %v48
    %v178 = vpop.f32.mrf.mxu0
    %v179 = vadd.f32 0.0, %v178
    %v180 = vpop.f32.mrf.mxu0
    %181 = vmatprep.mubr.f32.mxu0 0.0
    %182 = vmatmul.mubr.f32.gmra.mxu0 %v49
    %v183 = vpop.f32.mrf.mxu0
    %v184 = vadd.f32 0.0, %v183
    %v185 = vpop.f32.mrf.mxu0
    %186 = vmatprep.mubr.f32.mxu0 0.0
    %187 = vmatmul.mubr.f32.gmra.mxu0 %v50
    %v188 = vpop.f32.mrf.mxu0
    %v189 = vadd.f32 0.0, %v188
    %v190 = vpop.f32.mrf.mxu0
    %191 = vmatprep.mubr.f32.mxu0 0.0
    %192 = vmatmul.mubr.f32.gmra.mxu0 %v51
    %v193 = vpop.f32.mrf.mxu0
    %v194 = vadd.f32 0.0, %v193
    %v195 = vpop.f32.mrf.mxu0
    %196 = vmatprep.mubr.f32.mxu0 0.0
    %197 = vmatmul.mubr.f32.gmra.mxu0 %v52
    %v198 = vpop.f32.mrf.mxu0
    %v199 = vadd.f32 0.0, %v198
    %v200 = vpop.f32.mrf.mxu0
    %201 = vmatprep.mubr.f32.mxu0 0.0
    %202 = vmatmul.mubr.f32.gmra.mxu0 %v53
    %v203 = vpop.f32.mrf.mxu0
    %v204 = vadd.f32 0.0, %v203
    %v205 = vpop.f32.mrf.mxu0
    %206 = vmatprep.mubr.f32.mxu0 0.0
    %207 = vmatmul.mubr.f32.gmra.mxu0 %v54
    %v208 = vpop.f32.mrf.mxu0
    %v209 = vadd.f32 0.0, %v208
    %v210 = vpop.f32.mrf.mxu0
    %211 = vmatprep.mubr.f32.mxu0 0.0
    %212 = vmatmul.mubr.f32.gmra.mxu0 %v55
    %v213 = vpop.f32.mrf.mxu0
    %v214 = vadd.f32 0.0, %v213
    %v215 = vpop.f32.mrf.mxu0
    %216 = vdwg.mxu0
    %217 = vst [vmem:[#allocation7] sm:$0xff] %v139
    %218 = vst [vmem:[#allocation7 + $0x8] sm:$0xff] %v144
    %219 = vst [vmem:[#allocation7 + $0x10] sm:$0xff] %v149
    %220 = vst [vmem:[#allocation7 + $0x18] sm:$0xff] %v154
    %221 = vst [vmem:[#allocation7 + $0x20] sm:$0xff] %v159
    %222 = vst [vmem:[#allocation7 + $0x28] sm:$0xff] %v164
    %223 = vst [vmem:[#allocation7 + $0x30] sm:$0xff] %v169
    %224 = vst [vmem:[#allocation7 + $0x38] sm:$0xff] %v174
    %225 = vst [vmem:[#allocation7 + $0x40] sm:$0xff] %v179
    %226 = vst [vmem:[#allocation7 + $0x48] sm:$0xff] %v184
    %227 = vst [vmem:[#allocation7 + $0x50] sm:$0xff] %v189
    %228 = vst [vmem:[#allocation7 + $0x58] sm:$0xff] %v194
    %229 = vst [vmem:[#allocation7 + $0x60] sm:$0xff] %v199
    %230 = vst [vmem:[#allocation7 + $0x68] sm:$0xff] %v204
    %231 = vst [vmem:[#allocation7 + $0x70] sm:$0xff] %v209
    %232 = vst [vmem:[#allocation7 + $0x78] sm:$0xff] %v214
    // Predicated region
    $region18: #{tpu_custom_call.1} parent=1 // pred_check
      _
    $region19: #{tpu_custom_call.1} parent=1 // pred_check_branch
      %234 = sbr.rel (0) target = $region21
    $region20: #{tpu_custom_call.1} parent=1 // pred_region
      %s236 = ssub.s32 2048, 2048
      %237 = vsyncadd [#allocation4], %s236
      %s238 = sshll.u32 [#allocation7], 4
      %s239 = int_to_ptr.vmem [resolvable:$true] %s238
      %244 = dma.vmem_to_hbm [thread:$0]  %s239, 2048, %s2, [#allocation4], 128, 128, 8
    $region21: #{tpu_custom_call.1} parent=1 // pred_fallthru
      _
    // Predicated region
    $region22: #{tpu_custom_call.1} parent=1 // pred_check
      _
    $region23: #{tpu_custom_call.1} parent=1 // pred_check_branch
      %246 = sbr.rel (0) target = $region25
    $region24: #{tpu_custom_call.1} parent=1 // pred_region
      %247 = dma.done [#allocation4], 2048
    $region25: #{tpu_custom_call.1} parent=1 // pred_fallthru
      _
    %248 = vsyncpa [#allocation3], 1
    %249 = vsyncpa [#allocation6], 1
    %250 = vsyncpa [#allocation4], 1

</llo_original>
